<compile_context>
chip_gen: v5e
topology: v5e:2x2
jax: 0.10.0
libtpu: 0.0.40
codegen_flags: <defaults>
</compile_context>

<pallas_src>
import functools

import jax
import jax.numpy as jnp
from jax import lax
from jax.experimental import pallas as pl
from jax.experimental.pallas import tpu as pltpu

_EPS = 1e-8        # torch.cosine_similarity default eps
_D_CHUNK = 512     # lanes of D per accumulation step (bounds f32 temporaries)


def _cos_extreme_kernel(anc_ref, cand_ref, out_ref, *, total_c, blk_c, is_max):
    """Running max (is_max=True) / min over candidates of clamped cos(anc, cand)."""
    c_step = pl.program_id(1)

    anc = anc_ref[...].astype(jnp.float32)                   # [Bb, D]
    w_a = jnp.sum(anc * anc, axis=-1)                        # [Bb]

    bb, bc, d = cand_ref.shape
    dot = jnp.zeros((bb, bc), jnp.float32)
    w_c = jnp.zeros((bb, bc), jnp.float32)
    # Fused anc·c and ||c||^2: one candidate-chunk load feeds two VPU
    # multiplies; accumulation over D keeps f32 temporaries chunk-sized.
    for d0 in range(0, d, _D_CHUNK):
        dc = min(_D_CHUNK, d - d0)
        cand = cand_ref[:, :, pl.ds(d0, dc)].astype(jnp.float32)   # [Bb, bc, dc]
        a = anc[:, d0:d0 + dc][:, None, :]                         # [Bb, 1, dc]
        dot = dot + jnp.sum(a * cand, axis=-1)
        w_c = w_c + jnp.sum(cand * cand, axis=-1)

    # cos = dot / max(||a||*||c||, eps), clamped to [-1, 1] like the reference.
    inv = lax.rsqrt(jnp.maximum(w_a[:, None] * w_c, _EPS * _EPS))
    cos = jnp.clip(dot * inv, -1.0, 1.0)

    if total_c % blk_c != 0:
        # Last candidate block is partial: neutralise padded columns.
        cand_idx = c_step * blk_c + lax.broadcasted_iota(jnp.int32, (bb, bc), 1)
        sentinel = jnp.float32(-2.0 if is_max else 2.0)
        cos = jnp.where(cand_idx < total_c, cos, sentinel)

    red = (jnp.max(cos, axis=-1) if is_max else jnp.min(cos, axis=-1))[None, :]

    @pl.when(c_step == 0)
    def _():
        out_ref[...] = red

    @pl.when(c_step > 0)
    def _():
        cur = out_ref[...]
        out_ref[...] = jnp.maximum(cur, red) if is_max else jnp.minimum(cur, red)


def _round_up(x, m):
    return -(-x // m) * m


def _vmem_capacity_bytes():
    try:
        return int(pltpu.get_tpu_info().vmem_capacity_bytes)
    except Exception:
        return 64 << 20          # conservative fallback (v7x-sized VMEM)


def _pick_tiles(B, C, D, itemsize, vmem_bytes):
    """Batch / candidate tile sizes plus the scoped-VMEM limit to request."""
    if vmem_bytes >= (100 << 20):            # v5e / v6e class: 128 MiB physical
        vmem_limit, tile_budget = 100 << 20, 72 << 20
    else:                                    # v7x class: 64 MiB physical
        vmem_limit, tile_budget = 48 << 20, 28 << 20

    d_chunk = min(D, _D_CHUNK)

    def vmem_need(bb, bc):
        # Double-buffered input tiles + in-kernel f32 working set (anc copy,
        # one candidate chunk copy + product temp, dot / normsq accumulators).
        in_tiles = bb * D * itemsize + bb * bc * D * itemsize
        f32_work = bb * D * 4 + bb * bc * (8 * d_chunk + 16)
        return 2 * in_tiles + f32_work

    min_bc = min(C, 8)

    # Batch tile: full B when small, else 128-aligned; B >= 256 is split into
    # >= 2 grid steps so dimension_semantics=("parallel", ...) can shard the
    # batch axis across both v7x TensorCores.
    if B <= 128:
        blk_b = B
    elif B < 256:
        blk_b = B if vmem_need(B, min_bc) <= tile_budget else 128
    else:
        blk_b = min(_round_up(-(-B // 2), 128), 1024)
        while blk_b > 128 and vmem_need(blk_b, min_bc) > tile_budget:
            blk_b -= 128

    # Candidate tile: full C if it fits, else the largest multiple of 8.
    if C <= 8 or vmem_need(blk_b, C) <= tile_budget:
        blk_c = C
    else:
        blk_c = (C // 8) * 8
        while blk_c > 8 and vmem_need(blk_b, blk_c) > tile_budget:
            blk_c -= 8
    # TODO(synk): if even (blk_b=128, blk_c=8) overflows the budget (huge D),
    # add a third "arbitrary" grid axis over D with dot/normsq VMEM scratch.

    return blk_b, blk_c, vmem_limit


def _cos_extreme(anc, cand, *, is_max, vmem_bytes):
    """[B] f32: max (is_max) / min over the candidate set of clamped cosine."""
    B, D = anc.shape
    _, C, _ = cand.shape
    itemsize = max(jnp.dtype(anc.dtype).itemsize, jnp.dtype(cand.dtype).itemsize)
    blk_b, blk_c, vmem_limit = _pick_tiles(B, C, D, itemsize, vmem_bytes)

    kernel = functools.partial(_cos_extreme_kernel,
                               total_c=C, blk_c=blk_c, is_max=is_max)

    out = pl.pallas_call(
        kernel,
        grid=(pl.cdiv(B, blk_b), pl.cdiv(C, blk_c)),
        in_specs=[
            pl.BlockSpec((blk_b, D), lambda b, c: (b, 0)),
            pl.BlockSpec((blk_b, blk_c, D), lambda b, c: (b, c, 0)),
        ],
        out_specs=pl.BlockSpec((1, blk_b), lambda b, c: (0, b)),
        out_shape=jax.ShapeDtypeStruct((1, B), jnp.float32),
        compiler_params=pltpu.CompilerParams(
            dimension_semantics=("parallel", "arbitrary"),
            vmem_limit_bytes=vmem_limit,
        ),
        cost_estimate=pl.CostEstimate(
            flops=4 * B * C * D,
            transcendentals=B * C,
            bytes_accessed=B * D * itemsize * (C + 1) + 4 * B,
        ),
    )(anc, cand)
    return out[0]


def multi_arccosine_triplet_loss_soft_margin_easy(anc, poses, neges, margin=0.2):
    vmem_bytes = _vmem_capacity_bytes()
    best_cos_p = _cos_extreme(anc, poses, is_max=True, vmem_bytes=vmem_bytes)
    worst_cos_n = _cos_extreme(anc, neges, is_max=False, vmem_bytes=vmem_bytes)

    # TODO(synk): acos + log(1+exp) + mean epilogue (O(B) scalars) kept in
    # plain JAX; Mosaic has no guaranteed acos lowering in-kernel.
    d_p = jnp.arccos(best_cos_p)      # min over P of acos(cos_p)
    d_n = jnp.arccos(worst_cos_n)     # max over N of acos(cos_n)
    div = d_p - d_n + margin          # [B]
    loss = jnp.maximum(div, 0.0)      # max(cat([div, zeros]), dim=1).values
    loss = jax.nn.softplus(loss)      # log(1 + exp(.)), overflow-safe
    return jnp.mean(loss)


if __name__ == "__main__":
    # Module has no learned parameters (only margin=0.2), so nothing to init.
    B, P, N, D = 4, 3, 5, 32
    key = jax.random.PRNGKey(0)
    k1, k2, k3 = jax.random.split(key, 3)
    anc = jax.random.normal(k1, (B, D), dtype=jnp.float32)
    poses = jax.random.normal(k2, (B, P, D), dtype=jnp.float32)
    neges = jax.random.normal(k3, (B, N, D), dtype=jnp.float32)

    loss = jax.jit(multi_arccosine_triplet_loss_soft_margin_easy)(
        anc, poses, neges)
    jax.block_until_ready(loss)
    print("KERNEL_OK")
</pallas_src>

<mosaic_0001>
module attributes {stable_mosaic.version = 11 : i64} {
  func.func @_cos_extreme_kernel(%arg0: i32, %arg1: i32, %arg2: memref<4x32xf32, #tpu.memory_space<vmem>>, %arg3: memref<4x5x32xf32, #tpu.memory_space<vmem>>, %arg4: memref<1x4xf32, #tpu.memory_space<vmem>>) attributes {dimension_semantics = [#tpu.dimension_semantics<parallel>, #tpu.dimension_semantics<arbitrary>], iteration_bounds = array<i64: 1, 1>, scalar_prefetch = 0 : i64, scratch_operands = 0 : i64, tpu.core_type = #tpu.core_type<tc>, window_params = [{transform_indices = @transform_0, window_bounds = array<i64: 4, 32>}, {transform_indices = @transform_1, window_bounds = array<i64: 4, 5, 32>}, {transform_indices = @transform_2, window_bounds = array<i64: 1, 4>}]} {
    %c0 = arith.constant 0 : index
    %c0_0 = arith.constant 0 : index
    %0 = vector.load %arg2[%c0, %c0_0] : memref<4x32xf32, #tpu.memory_space<vmem>>, vector<4x32xf32>
    %1 = arith.mulf %0, %0 : vector<4x32xf32>
    %cst = arith.constant dense<0.000000e+00> : vector<4xf32>
    %2 = vector.multi_reduction <add>, %1, %cst [1] : vector<4x32xf32> to vector<4xf32>
    %cst_1 = arith.constant 0.000000e+00 : f32
    %3 = vector.broadcast %cst_1 : f32 to vector<4x5xf32>
    %cst_2 = arith.constant 0.000000e+00 : f32
    %4 = vector.broadcast %cst_2 : f32 to vector<4x5xf32>
    %c0_3 = arith.constant 0 : index
    %c0_4 = arith.constant 0 : index
    %c0_5 = arith.constant 0 : index
    %5 = vector.load %arg3[%c0_3, %c0_4, %c0_5] : memref<4x5x32xf32, #tpu.memory_space<vmem>>, vector<4x5x32xf32>
    %6 = vector.shape_cast %0 : vector<4x32xf32> to vector<4x1x32xf32>
    %7 = vector.broadcast %6 : vector<4x1x32xf32> to vector<4x5x32xf32>
    %8 = arith.mulf %7, %5 : vector<4x5x32xf32>
    %cst_6 = arith.constant dense<0.000000e+00> : vector<4x5xf32>
    %9 = vector.multi_reduction <add>, %8, %cst_6 [2] : vector<4x5x32xf32> to vector<4x5xf32>
    %10 = arith.addf %3, %9 : vector<4x5xf32>
    %11 = arith.mulf %5, %5 : vector<4x5x32xf32>
    %cst_7 = arith.constant dense<0.000000e+00> : vector<4x5xf32>
    %12 = vector.multi_reduction <add>, %11, %cst_7 [2] : vector<4x5x32xf32> to vector<4x5xf32>
    %13 = arith.addf %4, %12 : vector<4x5xf32>
    %14 = vector.shape_cast %2 : vector<4xf32> to vector<4x1xf32>
    %15 = vector.broadcast %14 : vector<4x1xf32> to vector<4x5xf32>
    %16 = arith.mulf %15, %13 : vector<4x5xf32>
    %cst_8 = arith.constant 1.000000e-16 : f32
    %17 = vector.broadcast %cst_8 : f32 to vector<4x5xf32>
    %18 = arith.maximumf %16, %17 : vector<4x5xf32>
    %19 = math.rsqrt %18 : vector<4x5xf32>
    %20 = arith.mulf %10, %19 : vector<4x5xf32>
    %cst_9 = arith.constant -1.000000e+00 : f32
    %cst_10 = arith.constant 1.000000e+00 : f32
    %21 = vector.broadcast %cst_9 : f32 to vector<4x5xf32>
    %22 = arith.maximumf %21, %20 : vector<4x5xf32>
    %23 = vector.broadcast %cst_10 : f32 to vector<4x5xf32>
    %24 = arith.minimumf %23, %22 : vector<4x5xf32>
    %cst_11 = arith.constant dense<0x7F800000> : vector<4xf32>
    %25 = vector.multi_reduction <minimumf>, %24, %cst_11 [1] : vector<4x5xf32> to vector<4xf32>
    %26 = vector.shape_cast %25 : vector<4xf32> to vector<1x4xf32>
    %c0_i32 = arith.constant 0 : i32
    %27 = arith.cmpi eq, %arg1, %c0_i32 : i32
    %28 = arith.extui %27 : i1 to i32
    %c0_i32_12 = arith.constant 0 : i32
    %29 = arith.cmpi ne, %28, %c0_i32_12 : i32
    scf.if %29 {
      %c0_15 = arith.constant 0 : index
      %c0_16 = arith.constant 0 : index
      %33 = vector.load %arg4[%c0_15, %c0_16] : memref<1x4xf32, #tpu.memory_space<vmem>>, vector<1x4xf32>
      tpu.vector_store %arg4[%c0_15, %c0_16], %26 {strides = array<i32>} : memref<1x4xf32, #tpu.memory_space<vmem>>, vector<1x4xf32>,
    } else {
    }
    %c0_i32_13 = arith.constant 0 : i32
    %30 = arith.cmpi sgt, %arg1, %c0_i32_13 : i32
    %31 = arith.extui %30 : i1 to i32
    %c0_i32_14 = arith.constant 0 : i32
    %32 = arith.cmpi ne, %31, %c0_i32_14 : i32
    scf.if %32 {
      %c0_15 = arith.constant 0 : index
      %c0_16 = arith.constant 0 : index
      %33 = vector.load %arg4[%c0_15, %c0_16] : memref<1x4xf32, #tpu.memory_space<vmem>>, vector<1x4xf32>
      %34 = arith.minimumf %33, %26 : vector<1x4xf32>
      %c0_17 = arith.constant 0 : index
      %c0_18 = arith.constant 0 : index
      %35 = vector.load %arg4[%c0_17, %c0_18] : memref<1x4xf32, #tpu.memory_space<vmem>>, vector<1x4xf32>
      tpu.vector_store %arg4[%c0_17, %c0_18], %34 {strides = array<i32>} : memref<1x4xf32, #tpu.memory_space<vmem>>, vector<1x4xf32>,
    } else {
    }
    return
  }
  func.func @transform_0(%arg0: i32, %arg1: i32) -> (i32, i32) {
    %c0_i32 = arith.constant 0 : i32
    %c0_i32_0 = arith.constant 0 : i32
    return %arg0, %c0_i32 : i32, i32
  }
  func.func @transform_1(%arg0: i32, %arg1: i32) -> (i32, i32, i32) {
    %c0_i32 = arith.constant 0 : i32
    %c0_i32_0 = arith.constant 0 : i32
    return %arg0, %arg1, %c0_i32 : i32, i32, i32
  }
  func.func @transform_2(%arg0: i32, %arg1: i32) -> (i32, i32) {
    %c0_i32 = arith.constant 0 : i32
    %c0_i32_0 = arith.constant 0 : i32
    return %c0_i32, %arg0 : i32, i32
  }
}

module attributes {stable_mosaic.version = 11 : i64} {
  func.func @_cos_extreme_kernel(%arg0: i32, %arg1: i32, %arg2: memref<4x32xf32, #tpu.memory_space<vmem>>, %arg3: memref<4x3x32xf32, #tpu.memory_space<vmem>>, %arg4: memref<1x4xf32, #tpu.memory_space<vmem>>) attributes {dimension_semantics = [#tpu.dimension_semantics<parallel>, #tpu.dimension_semantics<arbitrary>], iteration_bounds = array<i64: 1, 1>, scalar_prefetch = 0 : i64, scratch_operands = 0 : i64, tpu.core_type = #tpu.core_type<tc>, window_params = [{transform_indices = @transform_0, window_bounds = array<i64: 4, 32>}, {transform_indices = @transform_1, window_bounds = array<i64: 4, 3, 32>}, {transform_indices = @transform_2, window_bounds = array<i64: 1, 4>}]} {
    %c0 = arith.constant 0 : index
    %c0_0 = arith.constant 0 : index
    %0 = vector.load %arg2[%c0, %c0_0] : memref<4x32xf32, #tpu.memory_space<vmem>>, vector<4x32xf32>
    %1 = arith.mulf %0, %0 : vector<4x32xf32>
    %cst = arith.constant dense<0.000000e+00> : vector<4xf32>
    %2 = vector.multi_reduction <add>, %1, %cst [1] : vector<4x32xf32> to vector<4xf32>
    %cst_1 = arith.constant 0.000000e+00 : f32
    %3 = vector.broadcast %cst_1 : f32 to vector<4x3xf32>
    %cst_2 = arith.constant 0.000000e+00 : f32
    %4 = vector.broadcast %cst_2 : f32 to vector<4x3xf32>
    %c0_3 = arith.constant 0 : index
    %c0_4 = arith.constant 0 : index
    %c0_5 = arith.constant 0 : index
    %5 = vector.load %arg3[%c0_3, %c0_4, %c0_5] : memref<4x3x32xf32, #tpu.memory_space<vmem>>, vector<4x3x32xf32>
    %6 = vector.shape_cast %0 : vector<4x32xf32> to vector<4x1x32xf32>
    %7 = vector.broadcast %6 : vector<4x1x32xf32> to vector<4x3x32xf32>
    %8 = arith.mulf %7, %5 : vector<4x3x32xf32>
    %cst_6 = arith.constant dense<0.000000e+00> : vector<4x3xf32>
    %9 = vector.multi_reduction <add>, %8, %cst_6 [2] : vector<4x3x32xf32> to vector<4x3xf32>
    %10 = arith.addf %3, %9 : vector<4x3xf32>
    %11 = arith.mulf %5, %5 : vector<4x3x32xf32>
    %cst_7 = arith.constant dense<0.000000e+00> : vector<4x3xf32>
    %12 = vector.multi_reduction <add>, %11, %cst_7 [2] : vector<4x3x32xf32> to vector<4x3xf32>
    %13 = arith.addf %4, %12 : vector<4x3xf32>
    %14 = vector.shape_cast %2 : vector<4xf32> to vector<4x1xf32>
    %15 = vector.broadcast %14 : vector<4x1xf32> to vector<4x3xf32>
    %16 = arith.mulf %15, %13 : vector<4x3xf32>
    %cst_8 = arith.constant 1.000000e-16 : f32
    %17 = vector.broadcast %cst_8 : f32 to vector<4x3xf32>
    %18 = arith.maximumf %16, %17 : vector<4x3xf32>
    %19 = math.rsqrt %18 : vector<4x3xf32>
    %20 = arith.mulf %10, %19 : vector<4x3xf32>
    %cst_9 = arith.constant -1.000000e+00 : f32
    %cst_10 = arith.constant 1.000000e+00 : f32
    %21 = vector.broadcast %cst_9 : f32 to vector<4x3xf32>
    %22 = arith.maximumf %21, %20 : vector<4x3xf32>
    %23 = vector.broadcast %cst_10 : f32 to vector<4x3xf32>
    %24 = arith.minimumf %23, %22 : vector<4x3xf32>
    %cst_11 = arith.constant dense<0xFF800000> : vector<4xf32>
    %25 = vector.multi_reduction <maximumf>, %24, %cst_11 [1] : vector<4x3xf32> to vector<4xf32>
    %26 = vector.shape_cast %25 : vector<4xf32> to vector<1x4xf32>
    %c0_i32 = arith.constant 0 : i32
    %27 = arith.cmpi eq, %arg1, %c0_i32 : i32
    %28 = arith.extui %27 : i1 to i32
    %c0_i32_12 = arith.constant 0 : i32
    %29 = arith.cmpi ne, %28, %c0_i32_12 : i32
    scf.if %29 {
      %c0_15 = arith.constant 0 : index
      %c0_16 = arith.constant 0 : index
      %33 = vector.load %arg4[%c0_15, %c0_16] : memref<1x4xf32, #tpu.memory_space<vmem>>, vector<1x4xf32>
      tpu.vector_store %arg4[%c0_15, %c0_16], %26 {strides = array<i32>} : memref<1x4xf32, #tpu.memory_space<vmem>>, vector<1x4xf32>,
    } else {
    }
    %c0_i32_13 = arith.constant 0 : i32
    %30 = arith.cmpi sgt, %arg1, %c0_i32_13 : i32
    %31 = arith.extui %30 : i1 to i32
    %c0_i32_14 = arith.constant 0 : i32
    %32 = arith.cmpi ne, %31, %c0_i32_14 : i32
    scf.if %32 {
      %c0_15 = arith.constant 0 : index
      %c0_16 = arith.constant 0 : index
      %33 = vector.load %arg4[%c0_15, %c0_16] : memref<1x4xf32, #tpu.memory_space<vmem>>, vector<1x4xf32>
      %34 = arith.maximumf %33, %26 : vector<1x4xf32>
      %c0_17 = arith.constant 0 : index
      %c0_18 = arith.constant 0 : index
      %35 = vector.load %arg4[%c0_17, %c0_18] : memref<1x4xf32, #tpu.memory_space<vmem>>, vector<1x4xf32>
      tpu.vector_store %arg4[%c0_17, %c0_18], %34 {strides = array<i32>} : memref<1x4xf32, #tpu.memory_space<vmem>>, vector<1x4xf32>,
    } else {
    }
    return
  }
  func.func @transform_0(%arg0: i32, %arg1: i32) -> (i32, i32) {
    %c0_i32 = arith.constant 0 : i32
    %c0_i32_0 = arith.constant 0 : i32
    return %arg0, %c0_i32 : i32, i32
  }
  func.func @transform_1(%arg0: i32, %arg1: i32) -> (i32, i32, i32) {
    %c0_i32 = arith.constant 0 : i32
    %c0_i32_0 = arith.constant 0 : i32
    return %arg0, %arg1, %c0_i32 : i32, i32, i32
  }
  func.func @transform_2(%arg0: i32, %arg1: i32) -> (i32, i32) {
    %c0_i32 = arith.constant 0 : i32
    %c0_i32_0 = arith.constant 0 : i32
    return %c0_i32, %arg0 : i32, i32
  }
}

</mosaic_0001>

<llo_original>
// kernel: multi_arccosine_triplet_loss_soft_margin_easy.3
$region0: #{multi_arccosine_triplet_loss_soft_margin_easy.3}
  #allocation0 [shape = 'u32[]', space=smem, size = 0x4, offset = 0x4, fixed_abs, tag = 'smem constant byte address 0x4 - core index']
  #allocation1 [shape = 'u32[72,128]{1,0:T(1,128)}', space=vmem, size = 0x9000, scoped, tag = 'internal scratch']
  %s0 = inlined_call_operand.vmem [shape: f32[4,32], index: 0, kind: input, shape index: {}]
  %s1 = inlined_call_operand.vmem [shape: f32[4,5,32], index: 1, kind: input, shape index: {}]
  %s2 = inlined_call_operand.vmem [shape: f32[1,4], index: 2, kind: output, shape index: {}]
  %s3 = sld [smem:[#allocation0]]
  $region26: #{multi_arccosine_triplet_loss_soft_margin_easy.3} parent=0
    _
  %s5 = ssub.s32 1, %s3
  %s6 = scalar_select 0, %s5, %s3
  // Predicated region
  $region2: #{multi_arccosine_triplet_loss_soft_margin_easy.3} parent=0 // pred_check
    _
  $region3: #{multi_arccosine_triplet_loss_soft_margin_easy.3} parent=0 // pred_check_branch
    %8 = sbr.rel (0) target = $region5
  $region4: #{multi_arccosine_triplet_loss_soft_margin_easy.3} parent=0 // pred_region
    _
  $region5: #{multi_arccosine_triplet_loss_soft_margin_easy.3} parent=0 // pred_fallthru
    _
  // Predicated region
  $region6: #{multi_arccosine_triplet_loss_soft_margin_easy.3} parent=0 // pred_check
    _
  $region7: #{multi_arccosine_triplet_loss_soft_margin_easy.3} parent=0 // pred_check_branch
    %10 = sbr.rel (0) target = $region9
  $region8: #{multi_arccosine_triplet_loss_soft_margin_easy.3} parent=0 // pred_region
    _
  $region9: #{multi_arccosine_triplet_loss_soft_margin_easy.3} parent=0 // pred_fallthru
    _
  %v11 = vld [vmem:[%s0] sm:$0xf]
  %v12 = vmul.f32 %v11, %v11
  %vm13 = vcmask 257024
  %v14 = vsel %vm13, %v12, 0.0
  %15 = vadd.xlane.f32.xlu0 %v14
  %v16 = vpop.xlane.xlu0 %15
  %v17 = vld [vmem:[%s1] sm:$0x1f]
  %v18 = vld [vmem:[%s1 + $0x8] sm:$0x1f]
  %v19 = vld [vmem:[%s1 + $0x10] sm:$0x1f]
  %v20 = vld [vmem:[%s1 + $0x18] sm:$0x1f]
  %v22 = vrot.slane %v11, 1
  %v23 = vrot.slane %v11, 2
  %v24 = vrot.slane %v11, 3
  %v25 = vperm.slane %v11, 0
  %v26 = vperm.slane %v22, 0
  %v27 = vperm.slane %v23, 0
  %v28 = vperm.slane %v24, 0
  %v33 = vmul.f32 %v25, %v17
  %v34 = vmul.f32 %v26, %v18
  %v35 = vmul.f32 %v27, %v19
  %v36 = vmul.f32 %v28, %v20
  %vm37 = vcmask 258048
  %v38 = vsel %vm37, %v33, 0.0
  %39 = vadd.xlane.f32.xlu0 %v38
  %v40 = vpop.xlane.xlu0 %39
  %v41 = vsel %vm37, %v34, 0.0
  %42 = vadd.xlane.f32.xlu0 %v41
  %v43 = vpop.xlane.xlu0 %42
  %v44 = vsel %vm37, %v35, 0.0
  %45 = vadd.xlane.f32.xlu0 %v44
  %v46 = vpop.xlane.xlu0 %45
  %v47 = vsel %vm37, %v36, 0.0
  %48 = vadd.xlane.f32.xlu0 %v47
  %v49 = vpop.xlane.xlu0 %48
  %v50 = vadd.f32 %v40, 0.0
  %v51 = vadd.f32 %v43, 0.0
  %v52 = vadd.f32 %v46, 0.0
  %v53 = vadd.f32 %v49, 0.0
  %v54 = vmul.f32 %v17, %v17
  %v55 = vmul.f32 %v18, %v18
  %v56 = vmul.f32 %v19, %v19
  %v57 = vmul.f32 %v20, %v20
  %v58 = vsel %vm37, %v54, 0.0
  %59 = vadd.xlane.f32.xlu0 %v58
  %v60 = vpop.xlane.xlu0 %59
  %v61 = vsel %vm37, %v55, 0.0
  %62 = vadd.xlane.f32.xlu0 %v61
  %v63 = vpop.xlane.xlu0 %62
  %v64 = vsel %vm37, %v56, 0.0
  %65 = vadd.xlane.f32.xlu0 %v64
  %v66 = vpop.xlane.xlu0 %65
  %v67 = vsel %vm37, %v57, 0.0
  %68 = vadd.xlane.f32.xlu0 %v67
  %v69 = vpop.xlane.xlu0 %68
  %v70 = vadd.f32 %v60, 0.0
  %v71 = vadd.f32 %v63, 0.0
  %v72 = vadd.f32 %v66, 0.0
  %v73 = vadd.f32 %v69, 0.0
  %v78 = vlaneseq
  %v79 = vand.u32 %v78, 127
  %v80 = vperm.slane %v70, %v79
  %v81 = vperm.slane %v71, %v79
  %v82 = vperm.slane %v72, %v79
  %v83 = vperm.slane %v73, %v79
  %vm84 = vcmask 1041409
  %v85 = vsel %vm84, %v81, %v80
  %vm86 = vcmask 1042434
  %v87 = vsel %vm86, %v82, %v85
  %vm88 = vcmask 1043459
  %v89 = vsel %vm88, %v83, %v87
  %v91 = vmul.f32 %v16, %v89
  %v92 = vmax.f32 %v91, 1e-16
  %v93 = vrsqrt.pop %v92
  %v94 = vmul.f32 %v93, %v92
  %v95 = vmul.f32 %v94, %v93
  %v96 = vmul.f32 0.5, %v95
  %v97 = vsub.f32 1.5, %v96
  %v98 = vmul.f32 %v93, %v97
  %vm99 = vweird.f32 %v92
  %vm100 = vweird.f32 %v93
  %vm101 = vmor %vm99, %vm100
  %v102 = vsel %vm101, %v93, %v98
  %v104 = vperm.slane %v102, 0
  %v105 = vlaneseq
  %v106 = vshrl.u32 %v105, 7
  %108 = vset.pattern.permute.xlu0 %v106
  %109 = vperm.xlu0 %108, %v104
  %v110 = vpop.permute.xlu0 %109
  %v111 = vperm.slane %v102, 1
  %v112 = vlaneseq
  %v113 = vshrl.u32 %v112, 7
  %115 = vset.pattern.permute.xlu0 %v113
  %116 = vperm.xlu0 %115, %v111
  %v117 = vpop.permute.xlu0 %116
  %v118 = vperm.slane %v102, 2
  %v119 = vlaneseq
  %v120 = vshrl.u32 %v119, 7
  %122 = vset.pattern.permute.xlu0 %v120
  %123 = vperm.xlu0 %122, %v118
  %v124 = vpop.permute.xlu0 %123
  %v125 = vperm.slane %v102, 3
  %v126 = vlaneseq
  %v127 = vshrl.u32 %v126, 7
  %129 = vset.pattern.permute.xlu0 %v127
  %130 = vperm.xlu0 %129, %v125
  %v131 = vpop.permute.xlu0 %130
  %v136 = vmul.f32 %v50, %v110
  %v137 = vmul.f32 %v51, %v117
  %v138 = vmul.f32 %v52, %v124
  %v139 = vmul.f32 %v53, %v131
  %v140 = vmax.f32 %v136, -1.0
  %v141 = vmax.f32 %v137, -1.0
  %v142 = vmax.f32 %v138, -1.0
  %v143 = vmax.f32 %v139, -1.0
  %v144 = vmin.f32 %v140, 1.0
  %v145 = vmin.f32 %v141, 1.0
  %v146 = vmin.f32 %v142, 1.0
  %v147 = vmin.f32 %v143, 1.0
  %152 = vset.pattern.permute.xlu0 0
  %153 = vperm.xlu0 %152, %v144
  %v154 = vpop.permute.xlu0 %153
  %155 = vset.pattern.permute.xlu0 0
  %156 = vperm.xlu0 %155, %v145
  %v157 = vpop.permute.xlu0 %156
  %158 = vset.pattern.permute.xlu0 0
  %159 = vperm.xlu0 %158, %v146
  %v160 = vpop.permute.xlu0 %159
  %161 = vset.pattern.permute.xlu0 0
  %162 = vperm.xlu0 %161, %v147
  %v163 = vpop.permute.xlu0 %162
  %v164 = vperm.slane %v154, %v79
  %v165 = vperm.slane %v157, %v79
  %v166 = vperm.slane %v160, %v79
  %v167 = vperm.slane %v163, %v79
  %v168 = vsel %vm84, %v165, %v164
  %v169 = vsel %vm86, %v166, %v168
  %v170 = vsel %vm88, %v167, %v169
  %vm172 = vcmask 35840
  %v173 = vsel %vm172, %v170, inf
  %174 = vmin.xlane.f32.xlu0 %v173
  %v175 = vpop.xlane.xlu0 %174
  %p176 = scmp.eq.s32.totalorder 0, 0
  // Predicated region
  $region10: #{multi_arccosine_triplet_loss_soft_margin_easy.3} parent=0 // pred_check
    %p177 = pneg %p176
  $region11: #{multi_arccosine_triplet_loss_soft_margin_easy.3} parent=0 // pred_check_branch
    %179 = sbr.rel (%p177) target = $region13
  $region12: #{multi_arccosine_triplet_loss_soft_margin_easy.3} parent=0 // pred_region
    %v181 = vperm.slane %v175, %v79
    %vm183 = vcmask 24576
    %184 = vst.msk [vmem:[%s2] sm:$0x1] %vm183, %v181
  $region13: #{multi_arccosine_triplet_loss_soft_margin_easy.3} parent=0 // pred_fallthru
    _
  %p185 = scmp.gt.s32.totalorder 0, 0
  // Predicated region
  $region14: #{multi_arccosine_triplet_loss_soft_margin_easy.3} parent=0 // pred_check
    %p186 = pneg %p185
  $region15: #{multi_arccosine_triplet_loss_soft_margin_easy.3} parent=0 // pred_check_branch
    %188 = sbr.rel (%p186) target = $region17
  $region16: #{multi_arccosine_triplet_loss_soft_margin_easy.3} parent=0 // pred_region
    %v189 = vld [vmem:[%s2] sm:$0x1]
    %v191 = vperm.slane %v175, 0
    %v192 = vperm.slane %v175, 1
    %v193 = vperm.slane %v175, 2
    %v194 = vperm.slane %v175, 3
    %195 = vst [vmem:[#allocation1] ss:$9 sm:$0xff] %v191
    %s196 = scalar_lea.vmem [#allocation1], 1
    %197 = vst [vmem:[%s196] ss:$9 sm:$0xff] %v192
    %s198 = scalar_lea.vmem [#allocation1], 2
    %199 = vst [vmem:[%s198] ss:$9 sm:$0xff] %v193
    %s200 = scalar_lea.vmem [#allocation1], 3
    %201 = vst [vmem:[%s200] ss:$9 sm:$0xff] %v194
    %v202 = vld [vmem:[#allocation1] sm:$0xff]
    %203 = vset.pattern.permute.xlu0 0
    %204 = vperm.xlu0 %203, %v202
    %v205 = vpop.permute.xlu0 %204
    %v206 = vperm.slane %v205, %v79
    %v208 = vmin.f32 %v189, %v206
    %vm209 = vcmask 24576
    %210 = vst.msk [vmem:[%s2] sm:$0x1] %vm209, %v208
  $region17: #{multi_arccosine_triplet_loss_soft_margin_easy.3} parent=0 // pred_fallthru
    _
  // Predicated region
  $region18: #{multi_arccosine_triplet_loss_soft_margin_easy.3} parent=0 // pred_check
    _
  $region19: #{multi_arccosine_triplet_loss_soft_margin_easy.3} parent=0 // pred_check_branch
    %212 = sbr.rel (0) target = $region21
  $region20: #{multi_arccosine_triplet_loss_soft_margin_easy.3} parent=0 // pred_region
    _
  $region21: #{multi_arccosine_triplet_loss_soft_margin_easy.3} parent=0 // pred_fallthru
    _
  // Predicated region
  $region22: #{multi_arccosine_triplet_loss_soft_margin_easy.3} parent=0 // pred_check
    _
  $region23: #{multi_arccosine_triplet_loss_soft_margin_easy.3} parent=0 // pred_check_branch
    %214 = sbr.rel (0) target = $region25
  $region24: #{multi_arccosine_triplet_loss_soft_margin_easy.3} parent=0 // pred_region
    _
  $region25: #{multi_arccosine_triplet_loss_soft_margin_easy.3} parent=0 // pred_fallthru
    _

// kernel: multi_arccosine_triplet_loss_soft_margin_easy.2
$region0: #{multi_arccosine_triplet_loss_soft_margin_easy.2}
  #allocation0 [shape = 'u32[]', space=smem, size = 0x4, offset = 0x4, fixed_abs, tag = 'smem constant byte address 0x4 - core index']
  #allocation1 [shape = 'u32[72,128]{1,0:T(1,128)}', space=vmem, size = 0x9000, scoped, tag = 'internal scratch']
  %s0 = inlined_call_operand.vmem [shape: f32[4,32], index: 0, kind: input, shape index: {}]
  %s1 = inlined_call_operand.vmem [shape: f32[4,3,32], index: 1, kind: input, shape index: {}]
  %s2 = inlined_call_operand.vmem [shape: f32[1,4], index: 2, kind: output, shape index: {}]
  %s3 = sld [smem:[#allocation0]]
  $region26: #{multi_arccosine_triplet_loss_soft_margin_easy.2} parent=0
    _
  %s5 = ssub.s32 1, %s3
  %s6 = scalar_select 0, %s5, %s3
  // Predicated region
  $region2: #{multi_arccosine_triplet_loss_soft_margin_easy.2} parent=0 // pred_check
    _
  $region3: #{multi_arccosine_triplet_loss_soft_margin_easy.2} parent=0 // pred_check_branch
    %8 = sbr.rel (0) target = $region5
  $region4: #{multi_arccosine_triplet_loss_soft_margin_easy.2} parent=0 // pred_region
    _
  $region5: #{multi_arccosine_triplet_loss_soft_margin_easy.2} parent=0 // pred_fallthru
    _
  // Predicated region
  $region6: #{multi_arccosine_triplet_loss_soft_margin_easy.2} parent=0 // pred_check
    _
  $region7: #{multi_arccosine_triplet_loss_soft_margin_easy.2} parent=0 // pred_check_branch
    %10 = sbr.rel (0) target = $region9
  $region8: #{multi_arccosine_triplet_loss_soft_margin_easy.2} parent=0 // pred_region
    _
  $region9: #{multi_arccosine_triplet_loss_soft_margin_easy.2} parent=0 // pred_fallthru
    _
  %v11 = vld [vmem:[%s0] sm:$0xf]
  %v12 = vmul.f32 %v11, %v11
  %vm13 = vcmask 257024
  %v14 = vsel %vm13, %v12, 0.0
  %15 = vadd.xlane.f32.xlu0 %v14
  %v16 = vpop.xlane.xlu0 %15
  %v17 = vld [vmem:[%s1] sm:$0x7]
  %v18 = vld [vmem:[%s1 + $0x4] sm:$0x7]
  %v19 = vld [vmem:[%s1 + $0x8] sm:$0x7]
  %v20 = vld [vmem:[%s1 + $0xc] sm:$0x7]
  %v22 = vrot.slane %v11, 1
  %v23 = vrot.slane %v11, 2
  %v24 = vrot.slane %v11, 3
  %v25 = vperm.slane %v11, 0
  %v26 = vperm.slane %v22, 0
  %v27 = vperm.slane %v23, 0
  %v28 = vperm.slane %v24, 0
  %v33 = vmul.f32 %v25, %v17
  %v34 = vmul.f32 %v26, %v18
  %v35 = vmul.f32 %v27, %v19
  %v36 = vmul.f32 %v28, %v20
  %vm37 = vcmask 256000
  %v38 = vsel %vm37, %v33, 0.0
  %39 = vadd.xlane.f32.xlu0 %v38
  %v40 = vpop.xlane.xlu0 %39
  %v41 = vsel %vm37, %v34, 0.0
  %42 = vadd.xlane.f32.xlu0 %v41
  %v43 = vpop.xlane.xlu0 %42
  %v44 = vsel %vm37, %v35, 0.0
  %45 = vadd.xlane.f32.xlu0 %v44
  %v46 = vpop.xlane.xlu0 %45
  %v47 = vsel %vm37, %v36, 0.0
  %48 = vadd.xlane.f32.xlu0 %v47
  %v49 = vpop.xlane.xlu0 %48
  %v50 = vadd.f32 %v40, 0.0
  %v51 = vadd.f32 %v43, 0.0
  %v52 = vadd.f32 %v46, 0.0
  %v53 = vadd.f32 %v49, 0.0
  %v54 = vmul.f32 %v17, %v17
  %v55 = vmul.f32 %v18, %v18
  %v56 = vmul.f32 %v19, %v19
  %v57 = vmul.f32 %v20, %v20
  %v58 = vsel %vm37, %v54, 0.0
  %59 = vadd.xlane.f32.xlu0 %v58
  %v60 = vpop.xlane.xlu0 %59
  %v61 = vsel %vm37, %v55, 0.0
  %62 = vadd.xlane.f32.xlu0 %v61
  %v63 = vpop.xlane.xlu0 %62
  %v64 = vsel %vm37, %v56, 0.0
  %65 = vadd.xlane.f32.xlu0 %v64
  %v66 = vpop.xlane.xlu0 %65
  %v67 = vsel %vm37, %v57, 0.0
  %68 = vadd.xlane.f32.xlu0 %v67
  %v69 = vpop.xlane.xlu0 %68
  %v70 = vadd.f32 %v60, 0.0
  %v71 = vadd.f32 %v63, 0.0
  %v72 = vadd.f32 %v66, 0.0
  %v73 = vadd.f32 %v69, 0.0
  %v78 = vlaneseq
  %v79 = vand.u32 %v78, 127
  %v80 = vperm.slane %v70, %v79
  %v81 = vperm.slane %v71, %v79
  %v82 = vperm.slane %v72, %v79
  %v83 = vperm.slane %v73, %v79
  %vm84 = vcmask 1041409
  %v85 = vsel %vm84, %v81, %v80
  %vm86 = vcmask 1042434
  %v87 = vsel %vm86, %v82, %v85
  %vm88 = vcmask 1043459
  %v89 = vsel %vm88, %v83, %v87
  %v91 = vmul.f32 %v16, %v89
  %v92 = vmax.f32 %v91, 1e-16
  %v93 = vrsqrt.pop %v92
  %v94 = vmul.f32 %v93, %v92
  %v95 = vmul.f32 %v94, %v93
  %v96 = vmul.f32 0.5, %v95
  %v97 = vsub.f32 1.5, %v96
  %v98 = vmul.f32 %v93, %v97
  %vm99 = vweird.f32 %v92
  %vm100 = vweird.f32 %v93
  %vm101 = vmor %vm99, %vm100
  %v102 = vsel %vm101, %v93, %v98
  %v104 = vperm.slane %v102, 0
  %v105 = vlaneseq
  %v106 = vshrl.u32 %v105, 7
  %108 = vset.pattern.permute.xlu0 %v106
  %109 = vperm.xlu0 %108, %v104
  %v110 = vpop.permute.xlu0 %109
  %v111 = vperm.slane %v102, 1
  %v112 = vlaneseq
  %v113 = vshrl.u32 %v112, 7
  %115 = vset.pattern.permute.xlu0 %v113
  %116 = vperm.xlu0 %115, %v111
  %v117 = vpop.permute.xlu0 %116
  %v118 = vperm.slane %v102, 2
  %v119 = vlaneseq
  %v120 = vshrl.u32 %v119, 7
  %122 = vset.pattern.permute.xlu0 %v120
  %123 = vperm.xlu0 %122, %v118
  %v124 = vpop.permute.xlu0 %123
  %v125 = vperm.slane %v102, 3
  %v126 = vlaneseq
  %v127 = vshrl.u32 %v126, 7
  %129 = vset.pattern.permute.xlu0 %v127
  %130 = vperm.xlu0 %129, %v125
  %v131 = vpop.permute.xlu0 %130
  %v136 = vmul.f32 %v50, %v110
  %v137 = vmul.f32 %v51, %v117
  %v138 = vmul.f32 %v52, %v124
  %v139 = vmul.f32 %v53, %v131
  %v140 = vmax.f32 %v136, -1.0
  %v141 = vmax.f32 %v137, -1.0
  %v142 = vmax.f32 %v138, -1.0
  %v143 = vmax.f32 %v139, -1.0
  %v144 = vmin.f32 %v140, 1.0
  %v145 = vmin.f32 %v141, 1.0
  %v146 = vmin.f32 %v142, 1.0
  %v147 = vmin.f32 %v143, 1.0
  %152 = vset.pattern.permute.xlu0 0
  %153 = vperm.xlu0 %152, %v144
  %v154 = vpop.permute.xlu0 %153
  %155 = vset.pattern.permute.xlu0 0
  %156 = vperm.xlu0 %155, %v145
  %v157 = vpop.permute.xlu0 %156
  %158 = vset.pattern.permute.xlu0 0
  %159 = vperm.xlu0 %158, %v146
  %v160 = vpop.permute.xlu0 %159
  %161 = vset.pattern.permute.xlu0 0
  %162 = vperm.xlu0 %161, %v147
  %v163 = vpop.permute.xlu0 %162
  %v164 = vperm.slane %v154, %v79
  %v165 = vperm.slane %v157, %v79
  %v166 = vperm.slane %v160, %v79
  %v167 = vperm.slane %v163, %v79
  %v168 = vsel %vm84, %v165, %v164
  %v169 = vsel %vm86, %v166, %v168
  %v170 = vsel %vm88, %v167, %v169
  %vm172 = vcmask 19456
  %v173 = vsel %vm172, %v170, -inf
  %174 = vmax.xlane.f32.xlu0 %v173
  %v175 = vpop.xlane.xlu0 %174
  %p176 = scmp.eq.s32.totalorder 0, 0
  // Predicated region
  $region10: #{multi_arccosine_triplet_loss_soft_margin_easy.2} parent=0 // pred_check
    %p177 = pneg %p176
  $region11: #{multi_arccosine_triplet_loss_soft_margin_easy.2} parent=0 // pred_check_branch
    %179 = sbr.rel (%p177) target = $region13
  $region12: #{multi_arccosine_triplet_loss_soft_margin_easy.2} parent=0 // pred_region
    %v181 = vperm.slane %v175, %v79
    %vm183 = vcmask 24576
    %184 = vst.msk [vmem:[%s2] sm:$0x1] %vm183, %v181
  $region13: #{multi_arccosine_triplet_loss_soft_margin_easy.2} parent=0 // pred_fallthru
    _
  %p185 = scmp.gt.s32.totalorder 0, 0
  // Predicated region
  $region14: #{multi_arccosine_triplet_loss_soft_margin_easy.2} parent=0 // pred_check
    %p186 = pneg %p185
  $region15: #{multi_arccosine_triplet_loss_soft_margin_easy.2} parent=0 // pred_check_branch
    %188 = sbr.rel (%p186) target = $region17
  $region16: #{multi_arccosine_triplet_loss_soft_margin_easy.2} parent=0 // pred_region
    %v189 = vld [vmem:[%s2] sm:$0x1]
    %v191 = vperm.slane %v175, 0
    %v192 = vperm.slane %v175, 1
    %v193 = vperm.slane %v175, 2
    %v194 = vperm.slane %v175, 3
    %195 = vst [vmem:[#allocation1] ss:$9 sm:$0xff] %v191
    %s196 = scalar_lea.vmem [#allocation1], 1
    %197 = vst [vmem:[%s196] ss:$9 sm:$0xff] %v192
    %s198 = scalar_lea.vmem [#allocation1], 2
    %199 = vst [vmem:[%s198] ss:$9 sm:$0xff] %v193
    %s200 = scalar_lea.vmem [#allocation1], 3
    %201 = vst [vmem:[%s200] ss:$9 sm:$0xff] %v194
    %v202 = vld [vmem:[#allocation1] sm:$0xff]
    %203 = vset.pattern.permute.xlu0 0
    %204 = vperm.xlu0 %203, %v202
    %v205 = vpop.permute.xlu0 %204
    %v206 = vperm.slane %v205, %v79
    %v208 = vmax.f32 %v189, %v206
    %vm209 = vcmask 24576
    %210 = vst.msk [vmem:[%s2] sm:$0x1] %vm209, %v208
  $region17: #{multi_arccosine_triplet_loss_soft_margin_easy.2} parent=0 // pred_fallthru
    _
  // Predicated region
  $region18: #{multi_arccosine_triplet_loss_soft_margin_easy.2} parent=0 // pred_check
    _
  $region19: #{multi_arccosine_triplet_loss_soft_margin_easy.2} parent=0 // pred_check_branch
    %212 = sbr.rel (0) target = $region21
  $region20: #{multi_arccosine_triplet_loss_soft_margin_easy.2} parent=0 // pred_region
    _
  $region21: #{multi_arccosine_triplet_loss_soft_margin_easy.2} parent=0 // pred_fallthru
    _
  // Predicated region
  $region22: #{multi_arccosine_triplet_loss_soft_margin_easy.2} parent=0 // pred_check
    _
  $region23: #{multi_arccosine_triplet_loss_soft_margin_easy.2} parent=0 // pred_check_branch
    %214 = sbr.rel (0) target = $region25
  $region24: #{multi_arccosine_triplet_loss_soft_margin_easy.2} parent=0 // pred_region
    _
  $region25: #{multi_arccosine_triplet_loss_soft_margin_easy.2} parent=0 // pred_fallthru
    _

</llo_original>
